<compile_context>
chip_gen: v7x
topology: tpu7x:2x2x1
jax: 0.10.0
libtpu: 0.0.40
codegen_flags: <defaults>
</compile_context>

<pallas_src>
import functools

import jax
import jax.numpy as jnp
from jax import lax
from jax.experimental import pallas as pl
from jax.experimental.pallas import tpu as pltpu


def _scale_norm_kernel(scale_ref, x_ref, o_ref, *, eps):
    # scale_ref: SMEM scalar (scalar-prefetch), shape (1,)
    # x_ref / o_ref: VMEM tiles of shape (block_rows, hidden)
    xf = x_ref[...].astype(jnp.float32)
    # Sum of squares accumulated in f32, reduced along the lane axis (XLU).
    sq_sum = jnp.sum(xf * xf, axis=-1, keepdims=True)
    # clamp(||x||, min=eps) == sqrt(max(||x||^2, eps^2))  (sqrt is monotone),
    # so fold clamp + sqrt + divide into one EUP rsqrt (frees VALU slots).
    scale = scale_ref[0].astype(jnp.float32)
    inv = scale * lax.rsqrt(jnp.maximum(sq_sum, eps * eps))
    # Broadcast multiply in f32, round to the output dtype exactly once.
    o_ref[...] = (xf * inv).astype(o_ref.dtype)


def _pick_block_rows(rows, hidden, dtype):
    """VMEM-budget-driven row-block selection (dtype- and chip-aware).

    Returns (block_rows, vmem_limit_bytes)."""
    itemsize = jnp.dtype(dtype).itemsize
    # Sublane packing granularity: f32 packs 8 rows/vreg, bf16 16, int8/fp8 32.
    if itemsize >= 4:
        min_rows = 8
    elif itemsize == 2:
        min_rows = 16
    else:
        min_rows = 32

    # Per-generation VMEM capacity (v5e/v6e: 128 MiB, v7x: 64 MiB).
    try:
        vmem_cap = int(pltpu.get_tpu_info().vmem_capacity_bytes)
    except Exception:
        vmem_cap = 64 * 1024 * 1024  # conservative (v7x) fallback
    # Tiling budget: leave ~1/4 of physical VMEM for Mosaic internal scratch.
    tiling_budget = vmem_cap * 3 // 4

    # Per-row bytes of the per-grid-step working set:
    #   double-buffered input + double-buffered output (native dtype)
    #   + in-kernel f32 temporaries (~2 f32 values/elem: xf and the product).
    per_row_ws = hidden * (4 * itemsize + 8)
    rows_budget = max(min_rows, tiling_budget // max(per_row_ws, 1))

    # Target ~12 MiB per input tile: at 3.2 TB/s (v7x) that is ~4 us of DMA vs
    # ~0.35 us fixed per-step overhead (<5% tax); even cheaper on v5e/v6e.
    rows_target = max(min_rows, (12 * 1024 * 1024) // max(hidden * itemsize, 1))

    block_rows = min(rows_budget, rows_target)

    # Guarantee >= 2 grid steps whenever rows allow it, so a multi-TensorCore
    # chip (v7x) can shard the "parallel" grid axis across both cores.
    half_rows = (rows + 1) // 2
    half_cap = max(min_rows, ((half_rows + min_rows - 1) // min_rows) * min_rows)
    block_rows = min(block_rows, half_cap)

    # Round down to sublane granularity (never below min_rows).
    block_rows = max(min_rows, (block_rows // min_rows) * min_rows)

    # Tight VMEM limit: actual working set + a few MiB of margin, capped at
    # physical capacity, floored at 16 MiB (v5e's default scope is too small).
    ws_bytes = block_rows * per_row_ws
    vmem_limit = min(vmem_cap, max(ws_bytes + 8 * 1024 * 1024, 16 * 1024 * 1024))
    return block_rows, vmem_limit


def scale_norm(x, scale, eps=1e-05):
    """ScaleNorm forward. x: any shape (..., hidden); scale: scalar parameter."""
    orig_shape = x.shape
    hidden = orig_shape[-1]
    rows = 1
    for d in orig_shape[:-1]:
        rows *= d
    x2 = x.reshape(rows, hidden)

    block_rows, vmem_limit = _pick_block_rows(rows, hidden, x.dtype)

    # Ragged row counts: no host-side pad/slice. Pallas masks the stores of the
    # partial final block; garbage rows are row-independent and discarded.
    grid = (pl.cdiv(rows, block_rows),)
    scale_arr = jnp.asarray(scale, dtype=jnp.float32).reshape((1,))

    kernel = functools.partial(_scale_norm_kernel, eps=float(eps))

    out2 = pl.pallas_call(
        kernel,
        out_shape=jax.ShapeDtypeStruct((rows, hidden), x.dtype),
        grid_spec=pltpu.PrefetchScalarGridSpec(
            num_scalar_prefetch=1,
            grid=grid,
            in_specs=[
                pl.BlockSpec((block_rows, hidden), lambda i, scale_r: (i, 0)),
            ],
            out_specs=pl.BlockSpec((block_rows, hidden), lambda i, scale_r: (i, 0)),
        ),
        compiler_params=pltpu.CompilerParams(
            dimension_semantics=("parallel",),
            vmem_limit_bytes=int(vmem_limit),
        ),
    )(scale_arr, x2)

    return out2.reshape(orig_shape)


def scale_norm_ref(x, scale, eps=1e-05):
    """Pure-JAX reference mirroring the PyTorch forward."""
    norm = jnp.linalg.norm(x.astype(jnp.float32), axis=-1, keepdims=True)
    norm = jnp.maximum(norm, eps)
    return (x.astype(jnp.float32) * (scale / norm)).astype(x.dtype)


if __name__ == "__main__":
    key = jax.random.PRNGKey(0)
    batch, seq, hidden = 2, 8, 32

    # ScaleNorm stores a scalar parameter; typical init is sqrt(d_model).
    scale_param = jnp.float32(hidden) ** 0.5
    eps = 1e-05

    x = jax.random.normal(key, (batch, seq, hidden), dtype=jnp.float32)

    out = scale_norm(x, scale_param, eps)
    out = jax.block_until_ready(out)

    ref = scale_norm_ref(x, scale_param, eps)
    assert out.shape == x.shape and out.dtype == x.dtype
    assert jnp.allclose(out, ref, atol=1e-5, rtol=1e-4), "mismatch vs reference"

    # Also exercise a ragged row count (rows not a multiple of block_rows) to
    # cover the masked partial-final-block path.
    x_rag = jax.random.normal(jax.random.PRNGKey(1), (3, 5, hidden), dtype=jnp.float32)
    out_rag = jax.block_until_ready(scale_norm(x_rag, scale_param, eps))
    ref_rag = scale_norm_ref(x_rag, scale_param, eps)
    assert jnp.allclose(out_rag, ref_rag, atol=1e-5, rtol=1e-4), "ragged mismatch"

    print("KERNEL_OK")
</pallas_src>

<mosaic_0001>
module attributes {stable_mosaic.version = 11 : i64} {
  func.func @_scale_norm_kernel(%arg0: i32, %arg1: memref<1xf32, #tpu.memory_space<smem>>, %arg2: memref<8x32xf32, #tpu.memory_space<vmem>>, %arg3: memref<8x32xf32, #tpu.memory_space<vmem>>) attributes {dimension_semantics = [#tpu.dimension_semantics<parallel>], iteration_bounds = array<i64: 2>, scalar_prefetch = 1 : i64, scratch_operands = 0 : i64, tpu.core_type = #tpu.core_type<tc>, window_params = [{transform_indices = @transform_0, window_bounds = array<i64: 8, 32>}, {transform_indices = @transform_1, window_bounds = array<i64: 8, 32>}]} {
    %c0 = arith.constant 0 : index
    %c0_0 = arith.constant 0 : index
    %0 = vector.load %arg2[%c0, %c0_0] : memref<8x32xf32, #tpu.memory_space<vmem>>, vector<8x32xf32>
    %1 = arith.mulf %0, %0 : vector<8x32xf32>
    %cst = arith.constant dense<0.000000e+00> : vector<8xf32>
    %2 = vector.multi_reduction <add>, %1, %cst [1] : vector<8x32xf32> to vector<8xf32>
    %3 = vector.shape_cast %2 : vector<8xf32> to vector<8x1xf32>
    %c0_1 = arith.constant 0 : index
    %4 = memref.load %arg1[%c0_1] : memref<1xf32, #tpu.memory_space<smem>>
    %cst_2 = arith.constant 1.000000e-10 : f32
    %5 = vector.broadcast %cst_2 : f32 to vector<8x1xf32>
    %6 = arith.maximumf %3, %5 : vector<8x1xf32>
    %7 = math.rsqrt %6 : vector<8x1xf32>
    %8 = vector.broadcast %4 : f32 to vector<8x1xf32>
    %9 = arith.mulf %8, %7 : vector<8x1xf32>
    %10 = vector.broadcast %9 : vector<8x1xf32> to vector<8x32xf32>
    %11 = arith.mulf %0, %10 : vector<8x32xf32>
    %c0_3 = arith.constant 0 : index
    %c0_4 = arith.constant 0 : index
    %12 = vector.load %arg3[%c0_3, %c0_4] : memref<8x32xf32, #tpu.memory_space<vmem>>, vector<8x32xf32>
    tpu.vector_store %arg3[%c0_3, %c0_4], %11 {strides = array<i32>} : memref<8x32xf32, #tpu.memory_space<vmem>>, vector<8x32xf32>,
    return
  }
  func.func @transform_0(%arg0: i32, %arg1: memref<1xf32, #tpu.memory_space<smem>>) -> (i32, i32) {
    %c0_i32 = arith.constant 0 : i32
    %c0_i32_0 = arith.constant 0 : i32
    return %arg0, %c0_i32 : i32, i32
  }
  func.func @transform_1(%arg0: i32, %arg1: memref<1xf32, #tpu.memory_space<smem>>) -> (i32, i32) {
    %c0_i32 = arith.constant 0 : i32
    %c0_i32_0 = arith.constant 0 : i32
    return %arg0, %c0_i32 : i32, i32
  }
}

</mosaic_0001>

<llo_original>
// kernel: tpu_custom_call.1
$region0: #{tpu_custom_call.1}
  #allocation0 [shape = 'u32[]', space=smem, size = 0x4, offset = 0x4, fixed_abs, tag = 'smem constant byte address 0x4 - core index']
  #allocation1 [shape = 'u32[144,128]{1,0:T(1,128)}', space=vmem, size = 0x12000, scoped, tag = 'internal scratch']
  #allocation2 [shape = 's32[1]{0}', space=sflag, size = 0x4, scoped, tag = 'scoped memory for tpu_custom_call.1']
  #allocation3 [shape = 'f32[1]{0:T(128)S(6)}', space=smem, size = 0x200, scoped, tag = 'prefetched SMEM operand 0']
  %s0 = inlined_call_operand.<no memory space> [shape: f32[1], index: 0, kind: input, shape index: {}]
  %s1 = inlined_call_operand.hbm [shape: f32[16,32], index: 1, kind: input, shape index: {}]
  %s2 = inlined_call_operand.hbm [shape: f32[16,32], index: 2, kind: output, shape index: {}]
  %s3 = sld [smem:[#allocation0]]
  $region41: #{tpu_custom_call.1} parent=0
    _
  %s5 = ssub.s32 1, %s3
  %s6 = scalar_select 0, %s5, %s3
  %7 = sst [smem:[#allocation3]] %s0
  $region1: #{tpu_custom_call.1} parent=0
    #allocation4 [shape = 'u8[8192]{0}', space=vmem, size = 0x2000, scoped, tag = 'input window, operand 1']
    #allocation5 [shape = 's32[2]{0}', space=sflag, size = 0x8, scoped, tag = 'scoped memory for tpu_custom_call.1']
    #allocation6 [shape = 's32[2]{0}', space=sflag, size = 0x8, scoped, tag = 'scoped memory for tpu_custom_call.1']
    #allocation7 [shape = 'u8[8192]{0}', space=vmem, size = 0x2000, scoped, tag = 'output window, operand 0']
    %8 = vsyncpa [#allocation5], 0
    %s9 = scalar_lea.sflag [#allocation5], 1
    %10 = vsyncpa %s9, 0
    %11 = vsyncpa [#allocation6], 0
    %s12 = scalar_lea.sflag [#allocation6], 1
    %13 = vsyncpa %s12, 0
    loop: start=0, step=1, limit=4
    $region2: #{tpu_custom_call.1} parent=1 // loop_pre_header
      _
    $region3: #{tpu_custom_call.1} parent=1 // loop_header
      %s15 = sphi 0, %s19
      %p16 = scmp.ge.s32.totalorder %s15, 4
      %s25 = sphi 0, %s27
      %s28 = sphi 0, %s25
      %s29 = sphi 0, %s28
      %s45 = sphi 0, %s29
      %s51 = sphi 0, %s53
      %s54 = sphi 0, %s51
      %s55 = sphi 0, %s54
      %s71 = sphi 0, %s55
    $region4: #{tpu_custom_call.1} parent=1 // loop_header_branch
      %18 = sbr.rel (%p16) target = $region8
    $region5: #{tpu_custom_call.1} parent=1 // loop_body
      %s20 = ssub.s32 %s15, 1
      %s21 = ssub.s32 %s15, 2
      %s22 = sadd.s32 %s15, 1
      %s23 = ssub.s32 %s15, %s22
      %p24 = scmp.eq.s32.totalorder %s23, 0
      %s26 = sadd.s32 %s25, 1
      %s27 = scalar_select %p24, %s25, %s26
      %p30 = pneg %p24
      %p31 = scmp.eq.s32.totalorder %s15, 1
      %p32 = por %p30, %p31
      %p33 = scmp.ne.s32.totalorder %s25, %s28
      %p34 = scmp.eq.s32.totalorder %s15, 0
      %p35 = por %p33, %p34
      %p36 = scmp.ne.s32.totalorder %s25, %s28
      %p37 = scmp.eq.s32.totalorder %s20, 1
      %p38 = por %p36, %p37
      %p39 = scmp.ne.s32.totalorder %s28, %s29
      %p40 = scmp.eq.s32.totalorder %s20, 0
      %p41 = por %p39, %p40
      %p42 = scmp.ne.s32.totalorder %s28, %s29
      %p43 = scmp.eq.s32.totalorder %s21, 1
      %p44 = por %p42, %p43
      %p46 = scmp.ne.s32.totalorder %s29, %s45
      %p47 = scmp.eq.s32.totalorder %s21, 0
      %p48 = por %p46, %p47
      %s49 = ssub.s32 %s15, %s22
      %p50 = scmp.eq.s32.totalorder %s49, 0
      %s52 = sadd.s32 %s51, 1
      %s53 = scalar_select %p50, %s51, %s52
      %p56 = pneg %p50
      %p57 = scmp.eq.s32.totalorder %s15, 1
      %p58 = por %p56, %p57
      %p59 = scmp.ne.s32.totalorder %s51, %s54
      %p60 = scmp.eq.s32.totalorder %s15, 0
      %p61 = por %p59, %p60
      %p62 = scmp.ne.s32.totalorder %s51, %s54
      %p63 = scmp.eq.s32.totalorder %s20, 1
      %p64 = por %p62, %p63
      %p65 = scmp.ne.s32.totalorder %s54, %s55
      %p66 = scmp.eq.s32.totalorder %s20, 0
      %p67 = por %p65, %p66
      %p68 = scmp.ne.s32.totalorder %s54, %s55
      %p69 = scmp.eq.s32.totalorder %s21, 1
      %p70 = por %p68, %p69
      %p72 = scmp.ne.s32.totalorder %s55, %s71
      %p73 = scmp.eq.s32.totalorder %s21, 0
      %p74 = por %p72, %p73
      %p75 = scmp.le.s32.totalorder 1, %s15
      %p76 = scmp.lt.s32.totalorder %s15, 3
      %p77 = pnand %p75, %p76
      %p78 = pneg %p77
      // Predicated region
      $region9: #{tpu_custom_call.1} parent=5 // pred_check
        _
      $region10: #{tpu_custom_call.1} parent=5 // pred_check_branch
        %80 = sbr.rel (%p77) target = $region12
      $region11: #{tpu_custom_call.1} parent=5 // pred_region
        %s81 = ssub.s32 %s15, 1
      $region12: #{tpu_custom_call.1} parent=5 // pred_fallthru
        _
      %p82 = scmp.lt.s32.totalorder %s15, 2
      // Predicated region
      $region13: #{tpu_custom_call.1} parent=5 // pred_check
        %p83 = pneg %p82
      $region14: #{tpu_custom_call.1} parent=5 // pred_check_branch
        %85 = sbr.rel (%p83) target = $region16
      $region15: #{tpu_custom_call.1} parent=5 // pred_region
        // Predicated region
        $region17: #{tpu_custom_call.1} parent=15 // pred_check
          %p86 = pneg %p35
        $region18: #{tpu_custom_call.1} parent=15 // pred_check_branch
          %88 = sbr.rel (%p86) target = $region20
        $region19: #{tpu_custom_call.1} parent=15 // pred_region
          %s89 = sand.u32 %s25, 1
          %s90 = scalar_lea.sflag [#allocation5], %s89
          %s91 = sand.u32 %s25, 1
          %s92 = smul.addr %s91, 8
          %s93 = scalar_lea.vmem [#allocation4], %s92
          %s95 = ssub.s32 128, 128
          %96 = vsyncadd %s90, %s95
          %s97 = smul.addr %s15, 128
          %s98 = scalar_lea.hbm %s1, %s97
          %s100 = sshll.u32 %s93, 4
          %s101 = int_to_ptr.vmem [resolvable:$true] %s100
          %103 = dma.hbm_to_vmem [thread:$0]  %s98, 128, %s101, %s90
        $region20: #{tpu_custom_call.1} parent=15 // pred_fallthru
          _
      $region16: #{tpu_custom_call.1} parent=5 // pred_fallthru
        _
      %p104 = scmp.le.s32.totalorder 1, %s15
      %p105 = scmp.lt.s32.totalorder %s15, 3
      %p106 = pnand %p104, %p105
      %p107 = pneg %p106
      // Predicated region
      $region21: #{tpu_custom_call.1} parent=5 // pred_check
        _
      $region22: #{tpu_custom_call.1} parent=5 // pred_check_branch
        %109 = sbr.rel (%p106) target = $region24
      $region23: #{tpu_custom_call.1} parent=5 // pred_region
        %s110 = ssub.s32 %s15, 1
        %s111 = sand.u32 %s28, 1
        %s112 = scalar_lea.sflag [#allocation5], %s111
        %s113 = sand.u32 %s28, 1
        %s114 = smul.addr %s113, 8
        %s115 = scalar_lea.vmem [#allocation4], %s114
        // Predicated region
        $region25: #{tpu_custom_call.1} parent=23 // pred_check
          %p116 = pneg %p41
        $region26: #{tpu_custom_call.1} parent=23 // pred_check_branch
          %118 = sbr.rel (%p116) target = $region28
        $region27: #{tpu_custom_call.1} parent=23 // pred_region
          %119 = dma.done %s112, 128
        $region28: #{tpu_custom_call.1} parent=23 // pred_fallthru
          _
        %s120 = sand.u32 %s28, 1
        %s121 = scalar_lea.sflag [#allocation5], %s120
        %s122 = sand.u32 %s28, 1
        %s123 = smul.addr %s122, 8
        %s124 = scalar_lea.vmem [#allocation4], %s123
        %p125 = pneg %p41
        %p126 = pneg %p38
        %p127 = pneg %p67
        %p128 = pneg %p64
        %s129 = sand.u32 %s54, 1
        %s130 = scalar_lea.sflag [#allocation6], %s129
        %s131 = sand.u32 %s54, 1
        %s132 = smul.addr %s131, 8
        %s133 = scalar_lea.vmem [#allocation7], %s132
        %v134 = vld [vmem:[%s115] sm:$0xff]
        %v135 = vmul.f32 %v134, %v134
        %vm136 = vcmask 261120
        %v137 = vsel %vm136, %v135, 0.0
        %138 = vadd.xlane.f32.xlu0 %v137
        %v139 = vpop.xlane.xlu0 %138
        %s140 = sld [smem:[#allocation3]]
        %v141 = vmax.f32 %v139, 1e-10
        %v142 = vrsqrt.pop %v141
        %v143 = vstv %s140
        %v144 = vmul.f32 %v143, %v142
        %v145 = vmul.f32 %v134, %v144
        %146 = vst.msk [vmem:[%s133] sm:$0xff] %vm136, %v145
        %s147 = sand.u32 %s54, 1
        %s148 = scalar_lea.sflag [#allocation6], %s147
        %s149 = sand.u32 %s54, 1
        %s150 = smul.addr %s149, 8
        %s151 = scalar_lea.vmem [#allocation7], %s150
        // Predicated region
        $region29: #{tpu_custom_call.1} parent=23 // pred_check
          %p152 = pneg %p64
        $region30: #{tpu_custom_call.1} parent=23 // pred_check_branch
          %154 = sbr.rel (%p152) target = $region32
        $region31: #{tpu_custom_call.1} parent=23 // pred_region
          %s156 = ssub.s32 128, 128
          %157 = vsyncadd %s148, %s156
          %s158 = smul.addr %s20, 128
          %s159 = scalar_lea.hbm %s2, %s158
          %s161 = sshll.u32 %s151, 4
          %s162 = int_to_ptr.vmem [resolvable:$true] %s161
          %164 = dma.vmem_to_hbm [thread:$0]  %s162, 128, %s159, %s148
        $region32: #{tpu_custom_call.1} parent=23 // pred_fallthru
          _
      $region24: #{tpu_custom_call.1} parent=5 // pred_fallthru
        _
      %p165 = scmp.le.s32.totalorder 2, %s15
      // Predicated region
      $region33: #{tpu_custom_call.1} parent=5 // pred_check
        %p166 = pneg %p165
      $region34: #{tpu_custom_call.1} parent=5 // pred_check_branch
        %168 = sbr.rel (%p166) target = $region36
      $region35: #{tpu_custom_call.1} parent=5 // pred_region
        %s169 = ssub.s32 %s15, 2
        // Predicated region
        $region37: #{tpu_custom_call.1} parent=35 // pred_check
          %p170 = pneg %p70
        $region38: #{tpu_custom_call.1} parent=35 // pred_check_branch
          %172 = sbr.rel (%p170) target = $region40
        $region39: #{tpu_custom_call.1} parent=35 // pred_region
          %s173 = sand.u32 %s55, 1
          %s174 = scalar_lea.sflag [#allocation6], %s173
          %s175 = sand.u32 %s55, 1
          %s176 = smul.addr %s175, 8
          %s177 = scalar_lea.vmem [#allocation7], %s176
          %178 = dma.done %s174, 128
        $region40: #{tpu_custom_call.1} parent=35 // pred_fallthru
          _
      $region36: #{tpu_custom_call.1} parent=5 // pred_fallthru
        _
    $region6: #{tpu_custom_call.1} parent=1 // loop_footer
      %s19 = sadd.s32 1, %s15
    $region7: #{tpu_custom_call.1} parent=1 // loop_footer_branch
      %14 = sbr.rel target = $region3
    $region8: #{tpu_custom_call.1} parent=1 // loop_exit
      _
    %179 = vsyncpa [#allocation5], 1
    %s180 = scalar_lea.sflag [#allocation5], 1
    %181 = vsyncpa %s180, 1
    %182 = vsyncpa [#allocation6], 1
    %s183 = scalar_lea.sflag [#allocation6], 1
    %184 = vsyncpa %s183, 1

</llo_original>
